<compile_context>
chip_gen: v6e
topology: v6e:2x2x1
jax: 0.10.0
libtpu: 0.0.40
codegen_flags: <defaults>
</compile_context>

<pallas_src>
import jax
import jax.numpy as jnp
from jax.experimental import pallas as pl
from jax.experimental.pallas import tpu as pltpu

BLOCK_ROWS = 1024          # rows per grid step (1024*512 elems ~ 14 MiB/step of streams)
CMP_DTYPE = jnp.bool_      # comparison outputs emitted directly as bool (i8 mask stores)


def _kernel(x_ref,
            add_ref, sub_ref, mul_ref, div_ref, pow_ref,
            gt_ref, lt_ref, eq_ref):
    x = x_ref[...]
    add_ref[...] = x + 5.0
    sub_ref[...] = x - 3.0
    mul_ref[...] = x * 2.0
    div_ref[...] = x * 0.5            # exact: x / 2 in f32
    pow_ref[...] = x * x
    gt_ref[...] = x > 0.0
    lt_ref[...] = x < 10.0
    eq_ref[...] = x == 5.0            # exact float equality, matches torch semantics


def _run_pallas(x2d):
    rows, lane = x2d.shape
    dtype = x2d.dtype
    br = min(BLOCK_ROWS, rows)        # tiny inputs: one full-array block
    n_blocks = pl.cdiv(rows, br)      # partial last block handled by Pallas masking

    blk = pl.BlockSpec((br, lane), lambda i: (i, 0))
    f_out = jax.ShapeDtypeStruct((rows, lane), dtype)
    c_out = jax.ShapeDtypeStruct((rows, lane), CMP_DTYPE)

    return pl.pallas_call(
        _kernel,
        out_shape=(f_out,) * 5 + (c_out,) * 3,
        grid=(n_blocks,),
        in_specs=[blk],
        out_specs=(blk,) * 8,
        compiler_params=pltpu.CompilerParams(
            dimension_semantics=("parallel",),       # shards row axis across 2 TCs on v7x
            vmem_limit_bytes=48 * 1024 * 1024,       # ~28 MiB dbl-buffered footprint + headroom
        ),
    )(x2d)


def _pick_lane(n_elem):
    # Prefer a lane width that divides the element count: no pad / no slice copies.
    for lane in (512, 256, 128):
        if n_elem % lane == 0:
            return lane, False
    return 128, True


@jax.jit
def pt_module_forward(x):
    orig_shape = x.shape
    n_elem = x.size
    lane, needs_pad = _pick_lane(n_elem)
    rows = -(-n_elem // lane)          # ceil div (static, trace-time)
    padded = rows * lane

    x_flat = jnp.ravel(x)              # metadata-only under jit for contiguous input
    if needs_pad:                      # rare ragged case only
        x_flat = jnp.pad(x_flat, (0, padded - n_elem))
    x2d = x_flat.reshape(rows, lane)

    outs = _run_pallas(x2d)

    def unflatten(a):
        a = a.reshape(-1)
        if needs_pad:
            a = a[:n_elem]
        return a.reshape(orig_shape)

    return tuple(unflatten(o) for o in outs)


if __name__ == "__main__":
    key = jax.random.PRNGKey(0)
    # NCHW input, small shape (2*4*16*16 = 2048 elems -> lane=512 divides it, no pad)
    x = jax.random.normal(key, (2, 4, 16, 16), dtype=jnp.float32) * 5.0

    outs = jax.block_until_ready(pt_module_forward(x))

    # reference check in plain JAX
    refs = (x + 5, x - 3, x * 2, x / 2, x ** 2, x > 0, x < 10, x == 5)
    for got, ref in zip(outs, refs):
        assert got.shape == ref.shape and got.dtype == ref.dtype
        assert jnp.allclose(got.astype(jnp.float32), ref.astype(jnp.float32))

    print("KERNEL_OK")
</pallas_src>

<mosaic_0001>
module attributes {stable_mosaic.version = 11 : i64} {
  func.func @_kernel(%arg0: i32, %arg1: memref<4x512xf32, #tpu.memory_space<vmem>>, %arg2: memref<4x512xf32, #tpu.memory_space<vmem>>, %arg3: memref<4x512xf32, #tpu.memory_space<vmem>>, %arg4: memref<4x512xf32, #tpu.memory_space<vmem>>, %arg5: memref<4x512xf32, #tpu.memory_space<vmem>>, %arg6: memref<4x512xf32, #tpu.memory_space<vmem>>, %arg7: memref<4x512xi32, #tpu.memory_space<vmem>>, %arg8: memref<4x512xi32, #tpu.memory_space<vmem>>, %arg9: memref<4x512xi32, #tpu.memory_space<vmem>>) attributes {dimension_semantics = [#tpu.dimension_semantics<parallel>], iteration_bounds = array<i64: 1>, scalar_prefetch = 0 : i64, scratch_operands = 0 : i64, tpu.core_type = #tpu.core_type<tc>, window_params = [{transform_indices = @transform_0, window_bounds = array<i64: 4, 512>}, {transform_indices = @transform_1, window_bounds = array<i64: 4, 512>}, {transform_indices = @transform_2, window_bounds = array<i64: 4, 512>}, {transform_indices = @transform_3, window_bounds = array<i64: 4, 512>}, {transform_indices = @transform_4, window_bounds = array<i64: 4, 512>}, {transform_indices = @transform_5, window_bounds = array<i64: 4, 512>}, {transform_indices = @transform_6, window_bounds = array<i64: 4, 512>}, {transform_indices = @transform_7, window_bounds = array<i64: 4, 512>}, {transform_indices = @transform_8, window_bounds = array<i64: 4, 512>}]} {
    %c0 = arith.constant 0 : index
    %c0_0 = arith.constant 0 : index
    %0 = vector.load %arg1[%c0, %c0_0] : memref<4x512xf32, #tpu.memory_space<vmem>>, vector<4x512xf32>
    %cst = arith.constant 5.000000e+00 : f32
    %1 = vector.broadcast %cst : f32 to vector<4x512xf32>
    %2 = arith.addf %0, %1 : vector<4x512xf32>
    %c0_1 = arith.constant 0 : index
    %c0_2 = arith.constant 0 : index
    %3 = vector.load %arg2[%c0_1, %c0_2] : memref<4x512xf32, #tpu.memory_space<vmem>>, vector<4x512xf32>
    tpu.vector_store %arg2[%c0_1, %c0_2], %2 {strides = array<i32>} : memref<4x512xf32, #tpu.memory_space<vmem>>, vector<4x512xf32>,
    %cst_3 = arith.constant 3.000000e+00 : f32
    %4 = vector.broadcast %cst_3 : f32 to vector<4x512xf32>
    %5 = arith.subf %0, %4 : vector<4x512xf32>
    %c0_4 = arith.constant 0 : index
    %c0_5 = arith.constant 0 : index
    %6 = vector.load %arg3[%c0_4, %c0_5] : memref<4x512xf32, #tpu.memory_space<vmem>>, vector<4x512xf32>
    tpu.vector_store %arg3[%c0_4, %c0_5], %5 {strides = array<i32>} : memref<4x512xf32, #tpu.memory_space<vmem>>, vector<4x512xf32>,
    %cst_6 = arith.constant 2.000000e+00 : f32
    %7 = vector.broadcast %cst_6 : f32 to vector<4x512xf32>
    %8 = arith.mulf %0, %7 : vector<4x512xf32>
    %c0_7 = arith.constant 0 : index
    %c0_8 = arith.constant 0 : index
    %9 = vector.load %arg4[%c0_7, %c0_8] : memref<4x512xf32, #tpu.memory_space<vmem>>, vector<4x512xf32>
    tpu.vector_store %arg4[%c0_7, %c0_8], %8 {strides = array<i32>} : memref<4x512xf32, #tpu.memory_space<vmem>>, vector<4x512xf32>,
    %cst_9 = arith.constant 5.000000e-01 : f32
    %10 = vector.broadcast %cst_9 : f32 to vector<4x512xf32>
    %11 = arith.mulf %0, %10 : vector<4x512xf32>
    %c0_10 = arith.constant 0 : index
    %c0_11 = arith.constant 0 : index
    %12 = vector.load %arg5[%c0_10, %c0_11] : memref<4x512xf32, #tpu.memory_space<vmem>>, vector<4x512xf32>
    tpu.vector_store %arg5[%c0_10, %c0_11], %11 {strides = array<i32>} : memref<4x512xf32, #tpu.memory_space<vmem>>, vector<4x512xf32>,
    %13 = arith.mulf %0, %0 : vector<4x512xf32>
    %c0_12 = arith.constant 0 : index
    %c0_13 = arith.constant 0 : index
    %14 = vector.load %arg6[%c0_12, %c0_13] : memref<4x512xf32, #tpu.memory_space<vmem>>, vector<4x512xf32>
    tpu.vector_store %arg6[%c0_12, %c0_13], %13 {strides = array<i32>} : memref<4x512xf32, #tpu.memory_space<vmem>>, vector<4x512xf32>,
    %cst_14 = arith.constant 0.000000e+00 : f32
    %15 = vector.broadcast %cst_14 : f32 to vector<4x512xf32>
    %16 = arith.cmpf ogt, %0, %15 : vector<4x512xf32>
    %c0_15 = arith.constant 0 : index
    %c0_16 = arith.constant 0 : index
    %17 = vector.load %arg7[%c0_15, %c0_16] : memref<4x512xi32, #tpu.memory_space<vmem>>, vector<4x512xi32>
    %18 = arith.extui %16 : vector<4x512xi1> to vector<4x512xi32>
    %cst_17 = arith.constant dense<0> : vector<4x512xi32>
    %19 = arith.cmpi ne, %17, %cst_17 : vector<4x512xi32>
    tpu.vector_store %arg7[%c0_15, %c0_16], %18 {strides = array<i32>} : memref<4x512xi32, #tpu.memory_space<vmem>>, vector<4x512xi32>,
    %cst_18 = arith.constant 1.000000e+01 : f32
    %20 = vector.broadcast %cst_18 : f32 to vector<4x512xf32>
    %21 = arith.cmpf olt, %0, %20 : vector<4x512xf32>
    %c0_19 = arith.constant 0 : index
    %c0_20 = arith.constant 0 : index
    %22 = vector.load %arg8[%c0_19, %c0_20] : memref<4x512xi32, #tpu.memory_space<vmem>>, vector<4x512xi32>
    %23 = arith.extui %21 : vector<4x512xi1> to vector<4x512xi32>
    %cst_21 = arith.constant dense<0> : vector<4x512xi32>
    %24 = arith.cmpi ne, %22, %cst_21 : vector<4x512xi32>
    tpu.vector_store %arg8[%c0_19, %c0_20], %23 {strides = array<i32>} : memref<4x512xi32, #tpu.memory_space<vmem>>, vector<4x512xi32>,
    %cst_22 = arith.constant 5.000000e+00 : f32
    %25 = vector.broadcast %cst_22 : f32 to vector<4x512xf32>
    %26 = arith.cmpf oeq, %0, %25 : vector<4x512xf32>
    %c0_23 = arith.constant 0 : index
    %c0_24 = arith.constant 0 : index
    %27 = vector.load %arg9[%c0_23, %c0_24] : memref<4x512xi32, #tpu.memory_space<vmem>>, vector<4x512xi32>
    %28 = arith.extui %26 : vector<4x512xi1> to vector<4x512xi32>
    %cst_25 = arith.constant dense<0> : vector<4x512xi32>
    %29 = arith.cmpi ne, %27, %cst_25 : vector<4x512xi32>
    tpu.vector_store %arg9[%c0_23, %c0_24], %28 {strides = array<i32>} : memref<4x512xi32, #tpu.memory_space<vmem>>, vector<4x512xi32>,
    return
  }
  func.func @transform_0(%arg0: i32) -> (i32, i32) {
    %c0_i32 = arith.constant 0 : i32
    %c0_i32_0 = arith.constant 0 : i32
    return %arg0, %c0_i32 : i32, i32
  }
  func.func @transform_1(%arg0: i32) -> (i32, i32) {
    %c0_i32 = arith.constant 0 : i32
    %c0_i32_0 = arith.constant 0 : i32
    return %arg0, %c0_i32 : i32, i32
  }
  func.func @transform_2(%arg0: i32) -> (i32, i32) {
    %c0_i32 = arith.constant 0 : i32
    %c0_i32_0 = arith.constant 0 : i32
    return %arg0, %c0_i32 : i32, i32
  }
  func.func @transform_3(%arg0: i32) -> (i32, i32) {
    %c0_i32 = arith.constant 0 : i32
    %c0_i32_0 = arith.constant 0 : i32
    return %arg0, %c0_i32 : i32, i32
  }
  func.func @transform_4(%arg0: i32) -> (i32, i32) {
    %c0_i32 = arith.constant 0 : i32
    %c0_i32_0 = arith.constant 0 : i32
    return %arg0, %c0_i32 : i32, i32
  }
  func.func @transform_5(%arg0: i32) -> (i32, i32) {
    %c0_i32 = arith.constant 0 : i32
    %c0_i32_0 = arith.constant 0 : i32
    return %arg0, %c0_i32 : i32, i32
  }
  func.func @transform_6(%arg0: i32) -> (i32, i32) {
    %c0_i32 = arith.constant 0 : i32
    %c0_i32_0 = arith.constant 0 : i32
    return %arg0, %c0_i32 : i32, i32
  }
  func.func @transform_7(%arg0: i32) -> (i32, i32) {
    %c0_i32 = arith.constant 0 : i32
    %c0_i32_0 = arith.constant 0 : i32
    return %arg0, %c0_i32 : i32, i32
  }
  func.func @transform_8(%arg0: i32) -> (i32, i32) {
    %c0_i32 = arith.constant 0 : i32
    %c0_i32_0 = arith.constant 0 : i32
    return %arg0, %c0_i32 : i32, i32
  }
}

</mosaic_0001>

<llo_original>
// kernel: pt_module_forward.1
$region0: #{pt_module_forward.1}
  #allocation0 [shape = 'u32[]', space=smem, size = 0x4, offset = 0x4, fixed_abs, tag = 'smem constant byte address 0x4 - core index']
  #allocation1 [shape = 'u32[144,128]{1,0:T(1,128)}', space=vmem, size = 0x12000, scoped, tag = 'internal scratch']
  %s0 = inlined_call_operand.vmem [shape: f32[4,512], index: 0, kind: input, shape index: {}]
  %s1 = inlined_call_operand.vmem [shape: f32[4,512], index: 1, kind: output, shape index: {0}]
  %s2 = inlined_call_operand.vmem [shape: f32[4,512], index: 2, kind: output, shape index: {1}]
  %s3 = inlined_call_operand.vmem [shape: f32[4,512], index: 3, kind: output, shape index: {2}]
  %s4 = inlined_call_operand.vmem [shape: f32[4,512], index: 4, kind: output, shape index: {3}]
  %s5 = inlined_call_operand.vmem [shape: f32[4,512], index: 5, kind: output, shape index: {4}]
  %s6 = inlined_call_operand.vmem [shape: s32[4,512], index: 6, kind: output, shape index: {5}]
  %s7 = inlined_call_operand.vmem [shape: s32[4,512], index: 7, kind: output, shape index: {6}]
  %s8 = inlined_call_operand.vmem [shape: s32[4,512], index: 8, kind: output, shape index: {7}]
  %9 = xla_tuple %s1, %s2, %s3, %s4, %s5, %s6, %s7, %s8
  %s10 = sld [smem:[#allocation0]]
  $region70: #{pt_module_forward.1} parent=0
    _
  %s12 = ssub.s32 1, %s10
  %s13 = scalar_select 0, %s12, %s10
  // Predicated region
  $region2: #{pt_module_forward.1} parent=0 // pred_check
    _
  $region3: #{pt_module_forward.1} parent=0 // pred_check_branch
    %15 = sbr.rel (0) target = $region5
  $region4: #{pt_module_forward.1} parent=0 // pred_region
    _
  $region5: #{pt_module_forward.1} parent=0 // pred_fallthru
    _
  %v16 = vld [vmem:[%s0] sm:$0xff]
  %v17 = vld [vmem:[%s0 + $0x8] sm:$0xff]
  %v18 = vadd.f32 %v16, 5.0
  %v19 = vadd.f32 %v17, 5.0
  %20 = vst [vmem:[%s1] sm:$0xff] %v18
  %21 = vst [vmem:[%s1 + $0x8] sm:$0xff] %v19
  %v22 = vsub.f32 %v16, 3.0
  %v23 = vsub.f32 %v17, 3.0
  %24 = vst [vmem:[%s2] sm:$0xff] %v22
  %25 = vst [vmem:[%s2 + $0x8] sm:$0xff] %v23
  %v26 = vmul.f32 %v16, 2.0
  %v27 = vmul.f32 %v17, 2.0
  %28 = vst [vmem:[%s3] sm:$0xff] %v26
  %29 = vst [vmem:[%s3 + $0x8] sm:$0xff] %v27
  %v30 = vmul.f32 %v16, 0.5
  %v31 = vmul.f32 %v17, 0.5
  %32 = vst [vmem:[%s4] sm:$0xff] %v30
  %33 = vst [vmem:[%s4 + $0x8] sm:$0xff] %v31
  %v34 = vmul.f32 %v16, %v16
  %v35 = vmul.f32 %v17, %v17
  %36 = vst [vmem:[%s5] sm:$0xff] %v34
  %37 = vst [vmem:[%s5 + $0x8] sm:$0xff] %v35
  %vm38 = vcmp.gt.f32.partialorder %v16, 0.0
  %vm39 = vcmp.gt.f32.partialorder %v17, 0.0
  %v40 = vsel %vm38, 1, 0
  %v41 = vsel %vm39, 1, 0
  %42 = vst [vmem:[%s6] sm:$0xff] %v40
  %43 = vst [vmem:[%s6 + $0x8] sm:$0xff] %v41
  %vm44 = vcmp.lt.f32.partialorder %v16, 10.0
  %vm45 = vcmp.lt.f32.partialorder %v17, 10.0
  %v46 = vsel %vm44, 1, 0
  %v47 = vsel %vm45, 1, 0
  %48 = vst [vmem:[%s7] sm:$0xff] %v46
  %49 = vst [vmem:[%s7 + $0x8] sm:$0xff] %v47
  %vm50 = vcmp.eq.f32.partialorder %v16, 5.0
  %vm51 = vcmp.eq.f32.partialorder %v17, 5.0
  %v52 = vsel %vm50, 1, 0
  %v53 = vsel %vm51, 1, 0
  %54 = vst [vmem:[%s8] sm:$0xff] %v52
  %55 = vst [vmem:[%s8 + $0x8] sm:$0xff] %v53
  // Predicated region
  $region6: #{pt_module_forward.1} parent=0 // pred_check
    _
  $region7: #{pt_module_forward.1} parent=0 // pred_check_branch
    %57 = sbr.rel (0) target = $region9
  $region8: #{pt_module_forward.1} parent=0 // pred_region
    _
  $region9: #{pt_module_forward.1} parent=0 // pred_fallthru
    _
  // Predicated region
  $region10: #{pt_module_forward.1} parent=0 // pred_check
    _
  $region11: #{pt_module_forward.1} parent=0 // pred_check_branch
    %59 = sbr.rel (0) target = $region13
  $region12: #{pt_module_forward.1} parent=0 // pred_region
    _
  $region13: #{pt_module_forward.1} parent=0 // pred_fallthru
    _
  // Predicated region
  $region14: #{pt_module_forward.1} parent=0 // pred_check
    _
  $region15: #{pt_module_forward.1} parent=0 // pred_check_branch
    %61 = sbr.rel (0) target = $region17
  $region16: #{pt_module_forward.1} parent=0 // pred_region
    _
  $region17: #{pt_module_forward.1} parent=0 // pred_fallthru
    _
  // Predicated region
  $region18: #{pt_module_forward.1} parent=0 // pred_check
    _
  $region19: #{pt_module_forward.1} parent=0 // pred_check_branch
    %63 = sbr.rel (0) target = $region21
  $region20: #{pt_module_forward.1} parent=0 // pred_region
    _
  $region21: #{pt_module_forward.1} parent=0 // pred_fallthru
    _
  // Predicated region
  $region22: #{pt_module_forward.1} parent=0 // pred_check
    _
  $region23: #{pt_module_forward.1} parent=0 // pred_check_branch
    %65 = sbr.rel (0) target = $region25
  $region24: #{pt_module_forward.1} parent=0 // pred_region
    _
  $region25: #{pt_module_forward.1} parent=0 // pred_fallthru
    _
  // Predicated region
  $region26: #{pt_module_forward.1} parent=0 // pred_check
    _
  $region27: #{pt_module_forward.1} parent=0 // pred_check_branch
    %67 = sbr.rel (0) target = $region29
  $region28: #{pt_module_forward.1} parent=0 // pred_region
    _
  $region29: #{pt_module_forward.1} parent=0 // pred_fallthru
    _
  // Predicated region
  $region30: #{pt_module_forward.1} parent=0 // pred_check
    _
  $region31: #{pt_module_forward.1} parent=0 // pred_check_branch
    %69 = sbr.rel (0) target = $region33
  $region32: #{pt_module_forward.1} parent=0 // pred_region
    _
  $region33: #{pt_module_forward.1} parent=0 // pred_fallthru
    _
  // Predicated region
  $region34: #{pt_module_forward.1} parent=0 // pred_check
    _
  $region35: #{pt_module_forward.1} parent=0 // pred_check_branch
    %71 = sbr.rel (0) target = $region37
  $region36: #{pt_module_forward.1} parent=0 // pred_region
    _
  $region37: #{pt_module_forward.1} parent=0 // pred_fallthru
    _
  // Predicated region
  $region38: #{pt_module_forward.1} parent=0 // pred_check
    _
  $region39: #{pt_module_forward.1} parent=0 // pred_check_branch
    %73 = sbr.rel (0) target = $region41
  $region40: #{pt_module_forward.1} parent=0 // pred_region
    _
  $region41: #{pt_module_forward.1} parent=0 // pred_fallthru
    _
  // Predicated region
  $region42: #{pt_module_forward.1} parent=0 // pred_check
    _
  $region43: #{pt_module_forward.1} parent=0 // pred_check_branch
    %75 = sbr.rel (0) target = $region45
  $region44: #{pt_module_forward.1} parent=0 // pred_region
    _
  $region45: #{pt_module_forward.1} parent=0 // pred_fallthru
    _
  // Predicated region
  $region46: #{pt_module_forward.1} parent=0 // pred_check
    _
  $region47: #{pt_module_forward.1} parent=0 // pred_check_branch
    %77 = sbr.rel (0) target = $region49
  $region48: #{pt_module_forward.1} parent=0 // pred_region
    _
  $region49: #{pt_module_forward.1} parent=0 // pred_fallthru
    _
  // Predicated region
  $region50: #{pt_module_forward.1} parent=0 // pred_check
    _
  $region51: #{pt_module_forward.1} parent=0 // pred_check_branch
    %79 = sbr.rel (0) target = $region53
  $region52: #{pt_module_forward.1} parent=0 // pred_region
    _
  $region53: #{pt_module_forward.1} parent=0 // pred_fallthru
    _
  // Predicated region
  $region54: #{pt_module_forward.1} parent=0 // pred_check
    _
  $region55: #{pt_module_forward.1} parent=0 // pred_check_branch
    %81 = sbr.rel (0) target = $region57
  $region56: #{pt_module_forward.1} parent=0 // pred_region
    _
  $region57: #{pt_module_forward.1} parent=0 // pred_fallthru
    _
  // Predicated region
  $region58: #{pt_module_forward.1} parent=0 // pred_check
    _
  $region59: #{pt_module_forward.1} parent=0 // pred_check_branch
    %83 = sbr.rel (0) target = $region61
  $region60: #{pt_module_forward.1} parent=0 // pred_region
    _
  $region61: #{pt_module_forward.1} parent=0 // pred_fallthru
    _
  // Predicated region
  $region62: #{pt_module_forward.1} parent=0 // pred_check
    _
  $region63: #{pt_module_forward.1} parent=0 // pred_check_branch
    %85 = sbr.rel (0) target = $region65
  $region64: #{pt_module_forward.1} parent=0 // pred_region
    _
  $region65: #{pt_module_forward.1} parent=0 // pred_fallthru
    _
  // Predicated region
  $region66: #{pt_module_forward.1} parent=0 // pred_check
    _
  $region67: #{pt_module_forward.1} parent=0 // pred_check_branch
    %87 = sbr.rel (0) target = $region69
  $region68: #{pt_module_forward.1} parent=0 // pred_region
    _
  $region69: #{pt_module_forward.1} parent=0 // pred_fallthru
    _

</llo_original>
